<compile_context>
chip_gen: v6e
topology: v6e:2x2x1
jax: 0.10.0
libtpu: 0.0.40
codegen_flags: <defaults>
</compile_context>

<pallas_src>
import functools

import numpy as np
import jax
import jax.numpy as jnp
from jax.experimental import pallas as pl
from jax.experimental.pallas import tpu as pltpu

_LANES = 128


# ======================================================================
# Part 1: GridND (the spec module)
# ======================================================================

def _gridnd_kernel(base_ref, scale_ref, offset_ref, out_ref):
    """out[g, i] = base[g, i] + offset[g] + i * scale[g].

    linspace sub-grid g : base row = 0, offset = -1, scale = 2/(n-1)
    trainable sub-grid g: base row = live stored points (zero padded), o=s=0
    """
    col = jax.lax.broadcasted_iota(jnp.int32, out_ref.shape, 1).astype(jnp.float32)
    out_ref[...] = base_ref[...] + offset_ref[...] + col * scale_ref[...]


@functools.lru_cache(maxsize=None)
def _gridnd_slab_fn(g_pad, width):
    """Cached, jitted pallas_call producing the (g_pad, width) grid slab."""
    vmem = pl.BlockSpec(memory_space=pltpu.MemorySpace.VMEM)
    call = pl.pallas_call(
        _gridnd_kernel,
        out_shape=jax.ShapeDtypeStruct((g_pad, width), jnp.float32),
        in_specs=[vmem, vmem, vmem],
        out_specs=vmem,
    )
    return jax.jit(call)


# TODO(synk): IGrid.generate_grid() is abstract in the reference code; the two
# standard concrete TorchIntegral sub-grids (linspace / trainable 1-D) are used.
class LinspaceGrid1D:
    """Concrete IGrid: generate_grid() == linspace(-1, 1, size)."""

    def __init__(self, size):
        self.size_ = int(size)

    def ndim(self):
        return 1


class TrainableGrid1D:
    """Concrete IGrid: grid points are a stored (trainable) 1-D parameter."""

    def __init__(self, points):
        self.points = jnp.asarray(points, jnp.float32)   # live; read each generate_grid()
        self.size_ = int(self.points.shape[0])

    def ndim(self):
        return 1


class GridND:
    """N-dimensional grid; forward() returns the list of per-dimension grids,
    all generated by one fused, 8x128-aligned Pallas kernel."""

    def __init__(self, grid_objects):
        self.grid_objects = list(grid_objects)
        sizes = [g.size_ for g in self.grid_objects]
        self._G = len(self.grid_objects)
        self._Gp = max(8, -(-self._G // 8) * 8)                     # pad to 8 sublanes
        self._W = max(_LANES, -(-max(sizes) // _LANES) * _LANES)    # grids > 128 supported
        scale = np.zeros((self._Gp, 1), np.float32)
        offset = np.zeros((self._Gp, 1), np.float32)
        for g, obj in enumerate(self.grid_objects):
            if isinstance(obj, LinspaceGrid1D):
                offset[g, 0] = -1.0
                scale[g, 0] = 2.0 / (obj.size_ - 1) if obj.size_ > 1 else 0.0
        self._scale = jnp.asarray(scale)
        self._offset = jnp.asarray(offset)
        self._slab_fn = _gridnd_slab_fn(self._Gp, self._W)          # compiled once, cached
        self.curr_grid = None
        self.generate_grid()

    def ndim(self):
        return sum(g.ndim() for g in self.grid_objects)

    def _assemble_base(self):
        # Trainable points are read live here (not frozen at __init__).
        rows = []
        for obj in self.grid_objects:
            if isinstance(obj, TrainableGrid1D):
                pts = jnp.asarray(obj.points, jnp.float32)
                rows.append(jnp.pad(pts, (0, self._W - obj.size_)))
            else:
                rows.append(jnp.zeros((self._W,), jnp.float32))
        for _ in range(self._Gp - self._G):
            rows.append(jnp.zeros((self._W,), jnp.float32))
        return jnp.stack(rows, axis=0)

    def generate_grid(self):
        slab = self._slab_fn(self._assemble_base(), self._scale, self._offset)
        self.curr_grid = [slab[g, :obj.size_]
                          for g, obj in enumerate(self.grid_objects)]
        return self.curr_grid

    def reset_grid(self, dim, new_grid):
        objs = list(self.grid_objects)
        objs[dim] = new_grid
        self.__init__(objs)

    def forward(self):
        if self.curr_grid is None:
            return self.generate_grid()
        return self.curr_grid

    __call__ = forward

    def __iter__(self):
        return iter(self.grid_objects)


# ======================================================================
# Part 2: fused CNN kernel (the kernel the performance review targeted)
#   conv3x3(pad=1, replicate) -> ReLU -> avgpool2
#   conv5x5(pad=2, replicate) -> ReLU -> avgpool2
#   conv5x5(pad=2, replicate) -> ReLU -> avgpool2
#   take [:, :, 0, 0] -> Linear(64 -> 10)
# ======================================================================

def _avgpool2x2(y):
    """2x2 average pool of a channels-last (B, H, W, C) f32 activation using
    only layout-safe slices/adds (no dense pool matrices, no strided slices)."""
    b, h, w, c = y.shape
    z = y.reshape(b, h // 2, 2, w, c)                 # leading-dim split (layout-free)
    s = z[:, :, 0] + z[:, :, 1]                       # pool H -> (B, H/2, W, C)
    cols = [s[:, :, 2 * j:2 * j + 1, :] + s[:, :, 2 * j + 1:2 * j + 2, :]
            for j in range(w // 2)]                   # pool W via contiguous slice pairs
    return jnp.concatenate(cols, axis=2) * 0.25       # (B, H/2, W/2, C)


def _fused_cnn_kernel(xcol_ref, w1_ref, b1_ref, w2_ref, b2_ref,
                      w3_ref, b3_ref, wl_ref, bl_ref, out_ref):
    f32, bf16 = jnp.float32, jnp.bfloat16
    bb = xcol_ref.shape[0]                            # samples per grid step

    # ---- layer 1: im2col was built in the wrapper -> one matmul (M=BB*256, K=9) ----
    xs1 = xcol_ref[...].reshape(bb * 256, 9)          # (BB*256, 9) f32
    y1 = jnp.dot(xs1, w1_ref[...], preferred_element_type=f32) + b1_ref[...]
    y1 = jnp.maximum(y1, 0.0).reshape(bb, 16, 16, 16)
    x2 = _avgpool2x2(y1)                              # (BB, 8, 8, 16)

    # ---- layer 2: pad once, single im2col matmul (M=BB*64, K=400, N=32) ----
    xp = jnp.concatenate([x2[:, 0:1], x2[:, 0:1], x2,
                          x2[:, 7:8], x2[:, 7:8]], axis=1)            # (BB,12,8,16)
    xp = jnp.concatenate([xp[:, :, 0:1], xp[:, :, 0:1], xp,
                          xp[:, :, 7:8], xp[:, :, 7:8]], axis=2)      # (BB,12,12,16)
    colslab = [xp[:, :, kw:kw + 8, :] for kw in range(5)]             # 5 shifted slabs
    pieces = [colslab[kw][:, kh:kh + 8]
              for kh in range(5) for kw in range(5)]                  # (kh, kw) order
    xs2 = jnp.concatenate(pieces, axis=-1)                            # (BB,8,8,400)
    xs2 = xs2.reshape(bb * 64, 400).astype(bf16)                      # single bf16 cast
    y2 = jnp.dot(xs2, w2_ref[...], preferred_element_type=f32) + b2_ref[...]
    y2 = jnp.maximum(y2, 0.0).reshape(bb, 8, 8, 32)
    x3 = _avgpool2x2(y2)                                              # (BB, 4, 4, 32)

    # ---- layer 3: replicate-pad clamp + 25 taps of the 4 conv positions that
    # feed pooled (0,0) are folded into w3_ref (512, 256) -> one matmul ----
    p3 = jnp.concatenate([x3[:, i, j:j + 1, :]
                          for i in range(4) for j in range(4)], axis=-1)   # (BB,1,512)
    feat_in = jnp.concatenate([p3[b] for b in range(bb)], axis=0)          # (BB, 512)
    z3 = jnp.dot(feat_in.astype(bf16), w3_ref[...],
                 preferred_element_type=f32) + b3_ref[...]                 # (BB, 256)
    z3 = jnp.maximum(z3, 0.0)
    feat = 0.25 * (z3[:, 0:64] + z3[:, 64:128] +
                   z3[:, 128:192] + z3[:, 192:256])                        # (BB, 64)

    # ---- linear (Dout padded to 128 lanes -> unmasked, lane-dense store) ----
    logits = jnp.dot(feat.astype(bf16), wl_ref[...],
                     preferred_element_type=f32) + bl_ref[...]             # (BB, 128)
    out_ref[...] = logits


def fused_cnn_forward(x_nchw, params, block_b=8):
    """Single fused pallas_call; block_b samples per grid step (multiple of 8)."""
    assert block_b % 8 == 0
    n = x_nchw.shape[0]
    nblk = max(1, -(-n // block_b))
    n_pad = nblk * block_b

    # Layer-1 replicate pad + 9-tap im2col built once in the wrapper (Cin=1, tiny).
    x = x_nchw.reshape(n, 16, 16).astype(jnp.float32)
    xpad = jnp.pad(x, ((0, 0), (1, 1), (1, 1)), mode="edge")
    cols = [xpad[:, kh:kh + 16, kw:kw + 16] for kh in range(3) for kw in range(3)]
    x_col = jnp.stack(cols, axis=-1)                                   # (N, 16, 16, 9)
    if n_pad > n:
        x_col = jnp.pad(x_col, ((0, n_pad - n), (0, 0), (0, 0), (0, 0)))

    # Weights pre-packed into kernel-friendly, MXU-ready layouts.
    w1 = params["w1"].reshape(9, 16).astype(jnp.float32)
    b1 = params["b1"].reshape(1, 16).astype(jnp.float32)
    w2 = params["w2"].reshape(400, 32).astype(jnp.bfloat16)
    b2 = params["b2"].reshape(1, 32).astype(jnp.float32)

    # Fold layer-3 replicate-pad clamping + the 4 conv positions feeding pooled
    # (0,0) into one (512, 256) weight (exact: everything pre-ReLU is linear).
    sel = np.zeros((4, 25, 16), np.float32)
    for o, (oh, ow) in enumerate(((0, 0), (0, 1), (1, 0), (1, 1))):
        for kh in range(5):
            for kw in range(5):
                rh = min(max(oh + kh - 2, 0), 3)
                rw = min(max(ow + kw - 2, 0), 3)
                sel[o, kh * 5 + kw, rh * 4 + rw] = 1.0
    w3r = params["w3"].reshape(25, 32, 64)
    w3cat = jnp.einsum("otp,tcd->pcod", jnp.asarray(sel), w3r)
    w3cat = w3cat.reshape(512, 256).astype(jnp.bfloat16)
    b3t = jnp.tile(params["b3"].reshape(1, 64), (1, 4)).astype(jnp.float32)   # (1, 256)

    wl = jnp.pad(params["wl"], ((0, 0), (0, _LANES - 10))).astype(jnp.bfloat16)
    bl = jnp.pad(params["bl"], (0, _LANES - 10)).reshape(1, _LANES).astype(jnp.float32)

    def full_spec(a):
        nd = a.ndim
        return pl.BlockSpec(a.shape, lambda i, _nd=nd: (0,) * _nd)

    flops_per_sample = 2 * (256 * 9 * 16 + 64 * 400 * 32 + 512 * 256 + 64 * _LANES)
    bytes_accessed = int(x_col.size * 4 + n_pad * _LANES * 4 +
                         sum(int(t.size) * t.dtype.itemsize
                             for t in (w1, b1, w2, b2, w3cat, b3t, wl, bl)))

    out = pl.pallas_call(
        _fused_cnn_kernel,
        out_shape=jax.ShapeDtypeStruct((n_pad, _LANES), jnp.float32),
        grid=(nblk,),
        in_specs=[pl.BlockSpec((block_b, 16, 16, 9), lambda i: (i, 0, 0, 0)),
                  full_spec(w1), full_spec(b1), full_spec(w2), full_spec(b2),
                  full_spec(w3cat), full_spec(b3t), full_spec(wl), full_spec(bl)],
        out_specs=pl.BlockSpec((block_b, _LANES), lambda i: (i, 0)),
        compiler_params=pltpu.CompilerParams(
            dimension_semantics=("parallel",),          # megacore / 2-TC split
            vmem_limit_bytes=48 * 1024 * 1024),         # fits v7x's 64 MiB VMEM
        cost_estimate=pl.CostEstimate(flops=n_pad * flops_per_sample,
                                      transcendentals=0,
                                      bytes_accessed=bytes_accessed),
    )(x_col, w1, b1, w2, b2, w3cat, b3t, wl, bl)
    return out[:n, :10]


# ------------------------------ pure-JAX refs -------------------------------

def reference_cnn_forward(x_nchw, p):
    x = jnp.transpose(x_nchw, (0, 2, 3, 1))

    def conv(x, w, b, pad):
        xp = jnp.pad(x, ((0, 0), (pad, pad), (pad, pad), (0, 0)), mode="edge")
        y = jax.lax.conv_general_dilated(
            xp, w, (1, 1), "VALID", dimension_numbers=("NHWC", "HWIO", "NHWC"))
        return jax.nn.relu(y + b)

    def pool(x):
        n, h, w, c = x.shape
        return x.reshape(n, h // 2, 2, w // 2, 2, c).mean(axis=(2, 4))

    x = pool(conv(x, p["w1"], p["b1"], 1))
    x = pool(conv(x, p["w2"], p["b2"], 2))
    x = pool(conv(x, p["w3"], p["b3"], 2))
    x = x[:, 0, 0, :]
    return x @ p["wl"] + p["bl"]


# ---------------------------------- main ------------------------------------

if __name__ == "__main__":
    key = jax.random.PRNGKey(0)
    ks = jax.random.split(key, 10)

    # -------------------- Part 1: GridND (spec module) ----------------------
    trainable_pts = jnp.sort(
        jax.random.uniform(ks[0], (32,), jnp.float32, -1.0, 1.0))
    grid_nd = GridND([LinspaceGrid1D(16),
                      TrainableGrid1D(trainable_pts),
                      LinspaceGrid1D(200)])            # >128 points exercises wide slab
    grids = jax.block_until_ready(grid_nd())           # list of per-dimension 1-D grids
    assert grid_nd.ndim() == 3
    ref_grids = [np.linspace(-1.0, 1.0, 16).astype(np.float32),
                 np.asarray(trainable_pts),
                 np.linspace(-1.0, 1.0, 200).astype(np.float32)]
    for got, ref in zip(grids, ref_grids):
        assert got.shape == ref.shape
        np.testing.assert_allclose(np.asarray(got), ref, rtol=1e-5, atol=1e-5)
    # Trainable points are live: update them and regenerate.
    new_pts = jnp.linspace(-0.5, 0.5, 32, dtype=jnp.float32)
    grid_nd.grid_objects[1].points = new_pts
    regen = jax.block_until_ready(grid_nd.generate_grid())
    np.testing.assert_allclose(np.asarray(regen[1]), np.asarray(new_pts),
                               rtol=1e-6, atol=1e-6)

    # --------------- Part 2: fused CNN (reviewed kernel) --------------------
    params = {
        "w1": jax.random.normal(ks[1], (3, 3, 1, 16), jnp.float32) * 0.30,
        "b1": jax.random.normal(ks[2], (16,), jnp.float32) * 0.05,
        "w2": jax.random.normal(ks[3], (5, 5, 16, 32), jnp.float32) * 0.05,
        "b2": jax.random.normal(ks[4], (32,), jnp.float32) * 0.05,
        "w3": jax.random.normal(ks[5], (5, 5, 32, 64), jnp.float32) * 0.03,
        "b3": jax.random.normal(ks[6], (64,), jnp.float32) * 0.05,
        "wl": jax.random.normal(ks[7], (64, 10), jnp.float32) * 0.10,
        "bl": jax.random.normal(ks[8], (10,), jnp.float32) * 0.05,
    }
    x = jax.random.normal(ks[9], (16, 1, 16, 16), jnp.float32)

    out = jax.block_until_ready(fused_cnn_forward(x, params, block_b=8))
    ref = reference_cnn_forward(x, params)
    assert out.shape == (16, 10), out.shape
    np.testing.assert_allclose(np.asarray(out), np.asarray(ref),
                               rtol=2e-2, atol=2e-2)

    print("KERNEL_OK")
</pallas_src>

<mosaic_0001>
module attributes {stable_mosaic.version = 11 : i64} {
  func.func @_gridnd_kernel(%arg0: memref<8x256xf32, #tpu.memory_space<vmem>>, %arg1: memref<8x1xf32, #tpu.memory_space<vmem>>, %arg2: memref<8x1xf32, #tpu.memory_space<vmem>>, %arg3: memref<8x256xf32, #tpu.memory_space<vmem>>) attributes {dimension_semantics = [], scalar_prefetch = 0 : i64, scratch_operands = 0 : i64, tpu.core_type = #tpu.core_type<tc>} {
    %0 = tpu.iota {dimensions = array<i32: 1>} : vector<8x256xi32>
    %1 = arith.sitofp %0 : vector<8x256xi32> to vector<8x256xf32>
    %c0 = arith.constant 0 : index
    %c0_0 = arith.constant 0 : index
    %2 = vector.load %arg0[%c0, %c0_0] : memref<8x256xf32, #tpu.memory_space<vmem>>, vector<8x256xf32>
    %c0_1 = arith.constant 0 : index
    %c0_2 = arith.constant 0 : index
    %3 = vector.load %arg2[%c0_1, %c0_2] : memref<8x1xf32, #tpu.memory_space<vmem>>, vector<8x1xf32>
    %4 = vector.broadcast %3 : vector<8x1xf32> to vector<8x256xf32>
    %5 = arith.addf %2, %4 : vector<8x256xf32>
    %c0_3 = arith.constant 0 : index
    %c0_4 = arith.constant 0 : index
    %6 = vector.load %arg1[%c0_3, %c0_4] : memref<8x1xf32, #tpu.memory_space<vmem>>, vector<8x1xf32>
    %7 = vector.broadcast %6 : vector<8x1xf32> to vector<8x256xf32>
    %8 = arith.mulf %1, %7 : vector<8x256xf32>
    %9 = arith.addf %5, %8 : vector<8x256xf32>
    %c0_5 = arith.constant 0 : index
    %c0_6 = arith.constant 0 : index
    %10 = vector.load %arg3[%c0_5, %c0_6] : memref<8x256xf32, #tpu.memory_space<vmem>>, vector<8x256xf32>
    tpu.vector_store %arg3[%c0_5, %c0_6], %9 {strides = array<i32>} : memref<8x256xf32, #tpu.memory_space<vmem>>, vector<8x256xf32>,
    return
  }
}

</mosaic_0001>

<llo_original>
// kernel: tpu_custom_call.1
$region0: #{tpu_custom_call.1}
  #allocation0 [shape = 'u32[]', space=smem, size = 0x4, offset = 0x4, fixed_abs, tag = 'smem constant byte address 0x4 - core index']
  #allocation1 [shape = 'u32[144,128]{1,0:T(1,128)}', space=vmem, size = 0x12000, scoped, tag = 'internal scratch']
  %s0 = inlined_call_operand.vmem [shape: f32[8,256], index: 0, kind: input, shape index: {}]
  %s1 = inlined_call_operand.vmem [shape: f32[8,1], index: 1, kind: input, shape index: {}]
  %s2 = inlined_call_operand.vmem [shape: f32[8,1], index: 2, kind: input, shape index: {}]
  %s3 = inlined_call_operand.hbm [shape: f32[8,256], index: 3, kind: output, shape index: {}]
  %s4 = sld [smem:[#allocation0]]
  $region22: #{tpu_custom_call.1} parent=0
    _
  %s6 = ssub.s32 1, %s4
  %s7 = scalar_select 0, %s6, %s4
  $region1: #{tpu_custom_call.1} parent=0
    #allocation2 [shape = 'u8[8192]{0}', space=vmem, size = 0x2000, scoped, tag = 'output window, operand 0, single buffered']
    #allocation3 [shape = 's32[1]{0}', space=sflag, size = 0x4, scoped, tag = 'scoped memory for tpu_custom_call.1']
    %8 = vsyncpa [#allocation3], 0
    // Predicated region
    $region2: #{tpu_custom_call.1} parent=1 // pred_check
      _
    $region3: #{tpu_custom_call.1} parent=1 // pred_check_branch
      %10 = sbr.rel (0) target = $region5
    $region4: #{tpu_custom_call.1} parent=1 // pred_region
      _
    $region5: #{tpu_custom_call.1} parent=1 // pred_fallthru
      _
    // Predicated region
    $region6: #{tpu_custom_call.1} parent=1 // pred_check
      _
    $region7: #{tpu_custom_call.1} parent=1 // pred_check_branch
      %12 = sbr.rel (0) target = $region9
    $region8: #{tpu_custom_call.1} parent=1 // pred_region
      _
    $region9: #{tpu_custom_call.1} parent=1 // pred_fallthru
      _
    // Predicated region
    $region10: #{tpu_custom_call.1} parent=1 // pred_check
      _
    $region11: #{tpu_custom_call.1} parent=1 // pred_check_branch
      %14 = sbr.rel (0) target = $region13
    $region12: #{tpu_custom_call.1} parent=1 // pred_region
      _
    $region13: #{tpu_custom_call.1} parent=1 // pred_fallthru
      _
    %v15 = vlaneseq
    %v16 = vand.u32 %v15, 127
    %v17 = vadd.s32 %v16, 128
    %v18 = vcvt.s32.f32 %v16
    %v19 = vcvt.s32.f32 %v17
    %v20 = vld [vmem:[%s0] sm:$0xff]
    %v21 = vld [vmem:[%s0 + $0x8] sm:$0xff]
    %v22 = vld [vmem:[%s2] sm:$0xff]
    %24 = vset.pattern.permute.xlu0 0
    %25 = vperm.xlu0 %24, %v22
    %v26 = vpop.permute.xlu0 %25
    %v28 = vadd.f32 %v20, %v26
    %v29 = vadd.f32 %v21, %v26
    %v30 = vld [vmem:[%s1] sm:$0xff]
    %32 = vset.pattern.permute.xlu0 0
    %33 = vperm.xlu0 %32, %v30
    %v34 = vpop.permute.xlu0 %33
    %v36 = vmul.f32 %v18, %v34
    %v37 = vmul.f32 %v19, %v34
    %v38 = vadd.f32 %v28, %v36
    %v39 = vadd.f32 %v29, %v37
    %40 = vst [vmem:[#allocation2] sm:$0xff] %v38
    %41 = vst [vmem:[#allocation2 + $0x8] sm:$0xff] %v39
    // Predicated region
    $region14: #{tpu_custom_call.1} parent=1 // pred_check
      _
    $region15: #{tpu_custom_call.1} parent=1 // pred_check_branch
      %43 = sbr.rel (0) target = $region17
    $region16: #{tpu_custom_call.1} parent=1 // pred_region
      %s45 = ssub.s32 256, 256
      %46 = vsyncadd [#allocation3], %s45
      %s48 = sshll.u32 [#allocation2], 4
      %s49 = int_to_ptr.vmem [resolvable:$true] %s48
      %51 = dma.vmem_to_hbm [thread:$0]  %s49, 256, %s3, [#allocation3]
    $region17: #{tpu_custom_call.1} parent=1 // pred_fallthru
      _
    // Predicated region
    $region18: #{tpu_custom_call.1} parent=1 // pred_check
      _
    $region19: #{tpu_custom_call.1} parent=1 // pred_check_branch
      %53 = sbr.rel (0) target = $region21
    $region20: #{tpu_custom_call.1} parent=1 // pred_region
      %54 = dma.done [#allocation3], 256
    $region21: #{tpu_custom_call.1} parent=1 // pred_fallthru
      _
    %55 = vsyncpa [#allocation3], 1

</llo_original>
